<compile_context>
chip_gen: v7x
topology: tpu7x:2x2x1
jax: 0.10.0
libtpu: 0.0.40
codegen_flags: <defaults>
</compile_context>

<pallas_src>
import functools

import jax
import jax.numpy as jnp
from jax import lax
from jax.experimental import pallas as pl
from jax.experimental.pallas import tpu as pltpu

LANE = 128
ACC_ROWS = 8                          # one f32 vreg worth of sublanes
CHUNK_ROWS = 128                      # inner-loop granularity (multiple of 32)
TARGET_TILE_BYTES = 8 * 1024 * 1024   # ~8 MiB per input tile


def _cdiv(a, b):
    return -(-a // b)


def _num_tensorcores():
    """Best-effort TensorCore count per JAX device (for the megacore split)."""
    try:
        kind = jax.devices()[0].device_kind.lower()
    except Exception:
        return 2
    for tag in ("v2", "v3", "lite", "v5e", "v6e"):
        if tag in kind:
            return 1                  # single-TensorCore generations
    return 2                          # v4 / v5p / v7x style megacore


def _charbonnier_sum(x, y, eps2):
    """Plain-JAX partial SUM (not mean) for tiny unaligned tails."""
    d = x.astype(jnp.float32) - y.astype(jnp.float32)
    return jnp.sum(jnp.sqrt(d * d + jnp.float32(eps2)))


def _charbonnier_partial_kernel(x_ref, y_ref, out_ref, acc_ref, *,
                                eps2, bulk_chunks, chunks_per_block,
                                chunk_rows):
    p = pl.program_id(0)
    i = pl.program_id(1)
    n_inner = pl.num_programs(1)

    @pl.when(i == 0)
    def _():
        acc_ref[...] = jnp.zeros_like(acc_ref)

    # Number of valid CHUNK_ROWS-row chunks in this block: chunks_per_block for
    # interior blocks, fewer for the ragged last block, 0 for overshooting
    # (index-map-clamped) megacore slots.  Pure SCALAR math — the hot path has
    # no per-element mask and no iota.
    blk = p * n_inner + i
    n_valid = jnp.clip(bulk_chunks - blk * chunks_per_block, 0, chunks_per_block)

    def body(j, acc):
        r0 = pl.multiple_of(j * chunk_rows, chunk_rows)
        xd = x_ref[pl.ds(r0, chunk_rows), :].astype(jnp.float32)
        yd = y_ref[pl.ds(r0, chunk_rows), :].astype(jnp.float32)
        d = xd - yd
        v = jnp.sqrt(d * d + jnp.float32(eps2))
        # Fold the (chunk_rows, 128) chunk into an (8, 128) carry with pure
        # VPU adds; cross-lane work stays entirely out of the loop.
        return acc + jnp.sum(v.reshape(chunk_rows // ACC_ROWS, ACC_ROWS, LANE),
                             axis=0)

    acc_ref[...] += lax.fori_loop(
        0, n_valid, body, jnp.zeros((ACC_ROWS, LANE), jnp.float32))

    @pl.when(i == n_inner - 1)
    def _():
        out_ref[...] = acc_ref[...]


def charbonnier_loss(x, y, eps=1e-3):
    """Mean Charbonnier loss, matching torch.mean(sqrt((x-y)^2 + eps^2))."""
    assert x.shape == y.shape, (x.shape, y.shape)
    n_elem = x.size
    eps2 = float(eps) * float(eps)
    itemsize = jnp.dtype(x.dtype).itemsize
    sublane_mult = {4: 8, 2: 16, 1: 32}.get(itemsize, 8)

    xf = x.reshape(-1)
    yf = y.reshape(-1)

    tail_sum = jnp.float32(0.0)

    rows_total = n_elem // LANE
    lane_tail = n_elem - rows_total * LANE
    if lane_tail:
        # Rare: flat size not a multiple of 128.  Sum the <128-element ragged
        # tail in plain JAX; the bulk prefix slice below is the only copy.
        tail_sum = tail_sum + _charbonnier_sum(
            xf[rows_total * LANE:], yf[rows_total * LANE:], eps2)
        xb = xf[:rows_total * LANE]
        yb = yf[:rows_total * LANE]
    else:
        xb, yb = xf, yf              # free reshape path (no copy at all)

    # Inner-loop chunk size: multiple of the packed-sublane tile for the dtype.
    chunk_rows = min(CHUNK_ROWS, (rows_total // sublane_mult) * sublane_mult)
    if chunk_rows == 0:
        # Input too small for even one (sublane, 128) tile — pure JAX.
        total = tail_sum + _charbonnier_sum(xb, yb, eps2)
        return total / jnp.float32(n_elem)

    bulk_chunks = rows_total // chunk_rows
    bulk_rows = bulk_chunks * chunk_rows
    if bulk_rows < rows_total:
        # <= chunk_rows-1 ragged rows (< ~16K elems): tiny plain-JAX tail,
        # no copy / pad of the bulk.
        tail_sum = tail_sum + _charbonnier_sum(
            xb[bulk_rows * LANE:], yb[bulk_rows * LANE:], eps2)

    x2d = xb.reshape(rows_total, LANE)
    y2d = yb.reshape(rows_total, LANE)

    # Tile size: ~8 MiB per input tile, multiple of chunk_rows, capped at the
    # actual bulk.
    tile_rows_target = max(
        chunk_rows,
        (TARGET_TILE_BYTES // (LANE * itemsize)) // chunk_rows * chunk_rows)
    tile_rows = min(tile_rows_target, bulk_rows)
    chunks_per_block = tile_rows // chunk_rows

    n_blocks = _cdiv(bulk_rows, tile_rows)
    n_outer = max(1, min(_num_tensorcores(), n_blocks))   # megacore split
    n_inner = _cdiv(n_blocks, n_outer)

    def in_index_map(p, i):
        # Clamp so overshooting slots re-use the last valid block index (the
        # pipeline dedups consecutive identical indices, so the re-read is
        # elided); their contribution is zero via the scalar chunk bound.
        return (jnp.minimum(p * n_inner + i, n_blocks - 1), 0)

    kernel = functools.partial(
        _charbonnier_partial_kernel,
        eps2=eps2,
        bulk_chunks=bulk_chunks,
        chunks_per_block=chunks_per_block,
        chunk_rows=chunk_rows,
    )

    # Tight VMEM request: 2 inputs x 2 pipeline buffers x tile + headroom.
    tile_bytes = tile_rows * LANE * itemsize
    vmem_limit = int(min(48 * 1024 * 1024,
                         max(8 * 1024 * 1024,
                             2 * 2 * tile_bytes + 4 * 1024 * 1024)))

    bulk_elems = bulk_rows * LANE
    cost = pl.CostEstimate(
        flops=4 * bulk_elems,
        transcendentals=bulk_elems,
        bytes_accessed=2 * bulk_elems * itemsize
        + n_outer * ACC_ROWS * LANE * 4,
    )

    partials = pl.pallas_call(
        kernel,
        out_shape=jax.ShapeDtypeStruct((n_outer * ACC_ROWS, LANE), jnp.float32),
        grid_spec=pltpu.PrefetchScalarGridSpec(
            num_scalar_prefetch=0,
            grid=(n_outer, n_inner),
            in_specs=[
                pl.BlockSpec((tile_rows, LANE), in_index_map),
                pl.BlockSpec((tile_rows, LANE), in_index_map),
            ],
            out_specs=pl.BlockSpec((ACC_ROWS, LANE), lambda p, i: (p, 0)),
            scratch_shapes=[pltpu.VMEM((ACC_ROWS, LANE), jnp.float32)],
        ),
        compiler_params=pltpu.CompilerParams(
            dimension_semantics=("parallel", "arbitrary"),
            vmem_limit_bytes=vmem_limit,
        ),
        cost_estimate=cost,
    )(x2d, y2d)

    return (jnp.sum(partials) + tail_sum) / jnp.float32(n_elem)


if __name__ == "__main__":
    key = jax.random.PRNGKey(0)
    kx, ky = jax.random.split(key)
    x = jax.random.normal(kx, (2, 4, 16, 16), dtype=jnp.float32)  # NCHW
    y = jax.random.normal(ky, (2, 4, 16, 16), dtype=jnp.float32)

    loss = charbonnier_loss(x, y, eps=1e-3)
    loss = jax.block_until_ready(loss)

    # Reference check in plain JAX.
    diff = x - y
    ref = jnp.mean(jnp.sqrt(diff * diff + jnp.float32(1e-3) * jnp.float32(1e-3)))
    assert jnp.allclose(loss, ref, rtol=1e-5, atol=1e-6), (loss, ref)

    print("KERNEL_OK")
</pallas_src>

<mosaic_0001>
module attributes {stable_mosaic.version = 11 : i64} {
  func.func @_charbonnier_partial_kernel(%arg0: i32, %arg1: i32, %arg2: memref<16x128xf32, #tpu.memory_space<vmem>>, %arg3: memref<16x128xf32, #tpu.memory_space<vmem>>, %arg4: memref<8x128xf32, #tpu.memory_space<vmem>>, %arg5: memref<8x128xf32, #tpu.memory_space<vmem>>) attributes {dimension_semantics = [#tpu.dimension_semantics<parallel>, #tpu.dimension_semantics<arbitrary>], iteration_bounds = array<i64: 1, 1>, scalar_prefetch = 0 : i64, scratch_operands = 1 : i64, tpu.core_type = #tpu.core_type<tc>, window_params = [{transform_indices = @transform_0, window_bounds = array<i64: 16, 128>}, {transform_indices = @transform_1, window_bounds = array<i64: 16, 128>}, {transform_indices = @transform_2, window_bounds = array<i64: 8, 128>}]} {
    %c0_i32 = arith.constant 0 : i32
    %0 = arith.cmpi eq, %arg1, %c0_i32 : i32
    %1 = arith.extui %0 : i1 to i32
    %c0_i32_0 = arith.constant 0 : i32
    %2 = arith.cmpi ne, %1, %c0_i32_0 : i32
    scf.if %2 {
      %cst_12 = arith.constant 0.000000e+00 : f32
      %19 = vector.broadcast %cst_12 : f32 to vector<8x128xf32>
      %c0_13 = arith.constant 0 : index
      %c0_14 = arith.constant 0 : index
      %20 = vector.load %arg5[%c0_13, %c0_14] : memref<8x128xf32, #tpu.memory_space<vmem>>, vector<8x128xf32>
      tpu.vector_store %arg5[%c0_13, %c0_14], %19 {strides = array<i32>} : memref<8x128xf32, #tpu.memory_space<vmem>>, vector<8x128xf32>,
    } else {
    }
    %c1_i32 = arith.constant 1 : i32
    %3 = arith.muli %arg0, %c1_i32 : i32
    %4 = arith.addi %3, %arg1 : i32
    %c1_i32_1 = arith.constant 1 : i32
    %5 = arith.muli %4, %c1_i32_1 : i32
    %c1_i32_2 = arith.constant 1 : i32
    %6 = arith.subi %c1_i32_2, %5 : i32
    %c0_i32_3 = arith.constant 0 : i32
    %c1_i32_4 = arith.constant 1 : i32
    %7 = arith.maxsi %c0_i32_3, %6 : i32
    %8 = arith.minsi %c1_i32_4, %7 : i32
    %c0 = arith.constant 0 : index
    %c0_5 = arith.constant 0 : index
    %9 = vector.load %arg5[%c0, %c0_5] : memref<8x128xf32, #tpu.memory_space<vmem>>, vector<8x128xf32>
    %cst = arith.constant 0.000000e+00 : f32
    %10 = vector.broadcast %cst : f32 to vector<8x128xf32>
    %c0_i32_6 = arith.constant 0 : i32
    %11 = arith.subi %8, %c0_i32_6 : i32
    %12 = arith.addi %c0_i32_6, %11 : i32
    %c1_i32_7 = arith.constant 1 : i32
    %13 = scf.for %arg6 = %c0_i32_6 to %12 step %c1_i32_7 iter_args(%arg7 = %10) -> (vector<8x128xf32>)  : i32 {
      %c16_i32 = arith.constant 16 : i32
      %19 = arith.muli %arg6, %c16_i32 : i32
      %20 = tpu.assume_multiple %19, 16 : i32
      %21 = arith.index_cast %20 : i32 to index
      %c0_12 = arith.constant 0 : index
      %22 = vector.load %arg2[%21, %c0_12] : memref<16x128xf32, #tpu.memory_space<vmem>>, vector<16x128xf32>
      %23 = arith.index_cast %20 : i32 to index
      %c0_13 = arith.constant 0 : index
      %24 = vector.load %arg3[%23, %c0_13] : memref<16x128xf32, #tpu.memory_space<vmem>>, vector<16x128xf32>
      %25 = arith.subf %22, %24 : vector<16x128xf32>
      %26 = arith.mulf %25, %25 : vector<16x128xf32>
      %cst_14 = arith.constant 9.99999997E-7 : f32
      %27 = vector.broadcast %cst_14 : f32 to vector<16x128xf32>
      %28 = arith.addf %26, %27 : vector<16x128xf32>
      %29 = math.sqrt %28 : vector<16x128xf32>
      %30 = vector.shape_cast %29 : vector<16x128xf32> to vector<2x8x128xf32>
      %cst_15 = arith.constant dense<0.000000e+00> : vector<8x128xf32>
      %31 = vector.multi_reduction <add>, %30, %cst_15 [0] : vector<2x8x128xf32> to vector<8x128xf32>
      %32 = arith.addf %arg7, %31 : vector<8x128xf32>
      scf.yield %32 : vector<8x128xf32>
    }
    %14 = arith.addf %9, %13 : vector<8x128xf32>
    %c0_8 = arith.constant 0 : index
    %c0_9 = arith.constant 0 : index
    %15 = vector.load %arg5[%c0_8, %c0_9] : memref<8x128xf32, #tpu.memory_space<vmem>>, vector<8x128xf32>
    tpu.vector_store %arg5[%c0_8, %c0_9], %14 {strides = array<i32>} : memref<8x128xf32, #tpu.memory_space<vmem>>, vector<8x128xf32>,
    %c0_i32_10 = arith.constant 0 : i32
    %16 = arith.cmpi eq, %arg1, %c0_i32_10 : i32
    %17 = arith.extui %16 : i1 to i32
    %c0_i32_11 = arith.constant 0 : i32
    %18 = arith.cmpi ne, %17, %c0_i32_11 : i32
    scf.if %18 {
      %c0_12 = arith.constant 0 : index
      %c0_13 = arith.constant 0 : index
      %19 = vector.load %arg5[%c0_12, %c0_13] : memref<8x128xf32, #tpu.memory_space<vmem>>, vector<8x128xf32>
      %c0_14 = arith.constant 0 : index
      %c0_15 = arith.constant 0 : index
      %20 = vector.load %arg4[%c0_14, %c0_15] : memref<8x128xf32, #tpu.memory_space<vmem>>, vector<8x128xf32>
      tpu.vector_store %arg4[%c0_14, %c0_15], %19 {strides = array<i32>} : memref<8x128xf32, #tpu.memory_space<vmem>>, vector<8x128xf32>,
    } else {
    }
    return
  }
  func.func @transform_0(%arg0: i32, %arg1: i32) -> (i32, i32) {
    %c1_i32 = arith.constant 1 : i32
    %0 = arith.muli %arg0, %c1_i32 : i32
    %1 = arith.addi %0, %arg1 : i32
    %c0_i32 = arith.constant 0 : i32
    %2 = arith.minsi %1, %c0_i32 : i32
    %c0_i32_0 = arith.constant 0 : i32
    %c0_i32_1 = arith.constant 0 : i32
    return %2, %c0_i32_0 : i32, i32
  }
  func.func @transform_1(%arg0: i32, %arg1: i32) -> (i32, i32) {
    %c1_i32 = arith.constant 1 : i32
    %0 = arith.muli %arg0, %c1_i32 : i32
    %1 = arith.addi %0, %arg1 : i32
    %c0_i32 = arith.constant 0 : i32
    %2 = arith.minsi %1, %c0_i32 : i32
    %c0_i32_0 = arith.constant 0 : i32
    %c0_i32_1 = arith.constant 0 : i32
    return %2, %c0_i32_0 : i32, i32
  }
  func.func @transform_2(%arg0: i32, %arg1: i32) -> (i32, i32) {
    %c0_i32 = arith.constant 0 : i32
    %c0_i32_0 = arith.constant 0 : i32
    return %arg0, %c0_i32 : i32, i32
  }
}

</mosaic_0001>

<llo_original>
// kernel: tpu_custom_call.1
$region0: #{tpu_custom_call.1}
  #allocation0 [shape = 'u32[]', space=smem, size = 0x4, offset = 0x4, fixed_abs, tag = 'smem constant byte address 0x4 - core index']
  #allocation1 [shape = 'u32[144,128]{1,0:T(1,128)}', space=vmem, size = 0x12000, scoped, tag = 'internal scratch']
  #allocation2 [shape = 'f32[8,128]{1,0:T(8,128)}', space=vmem, size = 0x1000, scoped, tag = 'scratch operand']
  %s0 = inlined_call_operand.hbm [shape: f32[16,128], index: 0, kind: input, shape index: {}]
  %s1 = inlined_call_operand.hbm [shape: f32[16,128], index: 1, kind: input, shape index: {}]
  %s2 = inlined_call_operand.hbm [shape: f32[8,128], index: 2, kind: output, shape index: {}]
  %s3 = sld [smem:[#allocation0]]
  $region41: #{tpu_custom_call.1} parent=0
    _
  %s5 = ssub.s32 1, %s3
  %s6 = scalar_select 0, %s5, %s3
  $region1: #{tpu_custom_call.1} parent=0
    #allocation3 [shape = 'u8[8192]{0}', space=vmem, size = 0x2000, scoped, tag = 'input window, operand 0, single buffered']
    #allocation4 [shape = 's32[1]{0}', space=sflag, size = 0x4, scoped, tag = 'scoped memory for tpu_custom_call.1']
    #allocation5 [shape = 's32[1]{0}', space=sflag, size = 0x4, scoped, tag = 'scoped memory for tpu_custom_call.1']
    #allocation6 [shape = 'u8[8192]{0}', space=vmem, size = 0x2000, scoped, tag = 'input window, operand 1, single buffered']
    #allocation7 [shape = 's32[1]{0}', space=sflag, size = 0x4, scoped, tag = 'scoped memory for tpu_custom_call.1']
    #allocation8 [shape = 'u8[4096]{0}', space=vmem, size = 0x1000, scoped, tag = 'output window, operand 0, single buffered']
    %7 = vsyncpa [#allocation4], 0
    %8 = vsyncpa [#allocation7], 0
    %9 = vsyncpa [#allocation5], 0
    // Predicated region
    $region2: #{tpu_custom_call.1} parent=1 // pred_check
      _
    $region3: #{tpu_custom_call.1} parent=1 // pred_check_branch
      %11 = sbr.rel (0) target = $region5
    $region4: #{tpu_custom_call.1} parent=1 // pred_region
      %s12 = sadd.s32 0, 0
      %p13 = scmp.lt.s32.totalorder %s12, 0
      %s14 = scalar_select %p13, %s12, 0
      %s15 = smul.u32 2, %s14
      %s17 = ssub.s32 256, 256
      %18 = vsyncadd [#allocation4], %s17
      %s19 = smul.addr %s15, 128
      %s20 = scalar_lea.hbm %s0, %s19
      %s21 = sshll.u32 [#allocation3], 4
      %s22 = int_to_ptr.vmem [resolvable:$true] %s21
      %27 = dma.hbm_to_vmem [thread:$0]  %s20, 256, %s22, [#allocation4], 128, 128, 8
    $region5: #{tpu_custom_call.1} parent=1 // pred_fallthru
      _
    // Predicated region
    $region6: #{tpu_custom_call.1} parent=1 // pred_check
      _
    $region7: #{tpu_custom_call.1} parent=1 // pred_check_branch
      %29 = sbr.rel (0) target = $region9
    $region8: #{tpu_custom_call.1} parent=1 // pred_region
      %s30 = sadd.s32 0, 0
      %p31 = scmp.lt.s32.totalorder %s30, 0
      %s32 = scalar_select %p31, %s30, 0
      %s33 = smul.u32 2, %s32
      %s35 = ssub.s32 256, 256
      %36 = vsyncadd [#allocation7], %s35
      %s37 = smul.addr %s33, 128
      %s38 = scalar_lea.hbm %s1, %s37
      %s39 = sshll.u32 [#allocation6], 4
      %s40 = int_to_ptr.vmem [resolvable:$true] %s39
      %45 = dma.hbm_to_vmem [thread:$0]  %s38, 256, %s40, [#allocation7], 128, 128, 8
    $region9: #{tpu_custom_call.1} parent=1 // pred_fallthru
      _
    // Predicated region
    $region10: #{tpu_custom_call.1} parent=1 // pred_check
      _
    $region11: #{tpu_custom_call.1} parent=1 // pred_check_branch
      %47 = sbr.rel (0) target = $region13
    $region12: #{tpu_custom_call.1} parent=1 // pred_region
      %48 = dma.done [#allocation4], 256
    $region13: #{tpu_custom_call.1} parent=1 // pred_fallthru
      _
    // Predicated region
    $region14: #{tpu_custom_call.1} parent=1 // pred_check
      _
    $region15: #{tpu_custom_call.1} parent=1 // pred_check_branch
      %50 = sbr.rel (0) target = $region17
    $region16: #{tpu_custom_call.1} parent=1 // pred_region
      %51 = dma.done [#allocation7], 256
    $region17: #{tpu_custom_call.1} parent=1 // pred_fallthru
      _
    %s52 = sadd.s32 0, 0
    %p53 = scmp.lt.s32.totalorder %s52, 0
    %s54 = scalar_select %p53, %s52, 0
    %s55 = smul.u32 2, %s54
    %s56 = sadd.s32 0, 0
    %p57 = scmp.lt.s32.totalorder %s56, 0
    %s58 = scalar_select %p57, %s56, 0
    %s59 = smul.u32 2, %s58
    %p60 = scmp.eq.s32.totalorder 0, 0
    // Predicated region
    $region18: #{tpu_custom_call.1} parent=1 // pred_check
      %p61 = pneg %p60
    $region19: #{tpu_custom_call.1} parent=1 // pred_check_branch
      %63 = sbr.rel (%p61) target = $region21
    $region20: #{tpu_custom_call.1} parent=1 // pred_region
      %64 = vst [vmem:[#allocation2] sm:$0xff] 0.0
    $region21: #{tpu_custom_call.1} parent=1 // pred_fallthru
      _
    %s65 = sadd.s32 0, 0
    %s66 = ssub.s32 1, %s65
    %p67 = scmp.gt.s32.totalorder %s66, 0
    %s68 = scalar_select %p67, %s66, 0
    %p69 = scmp.lt.s32.totalorder %s68, 1
    %s70 = scalar_select %p69, %s68, 1
    %v71 = vld [vmem:[#allocation2] sm:$0xff]
    // While loop
    $region22: #{tpu_custom_call.1} parent=1 // loop_pre_header
      _
    $region23: #{tpu_custom_call.1} parent=1 // loop_header
      %s73 = sphi 0, %s75
      %p74 = scmp.ge.s32.totalorder %s73, %s70
      %v78 = vphi 0.0, %v107
    $region24: #{tpu_custom_call.1} parent=1 // loop_header_branch
      %77 = sbr.rel (%p74) target = $region28
    $region25: #{tpu_custom_call.1} parent=1 // loop_body
      %s79 = smul.u32 %s73, 16
      %s80 = scalar_lea.vmem [#allocation3], %s79
      %v81 = vld [vmem:[%s80] sm:$0xff]
      %v82 = vld [vmem:[%s80 + $0x8] sm:$0xff]
      %s83 = scalar_lea.vmem [#allocation6], %s79
      %v84 = vld [vmem:[%s83] sm:$0xff]
      %v85 = vld [vmem:[%s83 + $0x8] sm:$0xff]
      %v86 = vsub.f32 %v81, %v84
      %v87 = vsub.f32 %v82, %v85
      %v88 = vmul.f32 %v86, %v86
      %v89 = vmul.f32 %v87, %v87
      %v90 = vadd.f32 %v88, 1e-06
      %v91 = vadd.f32 %v89, 1e-06
      %v92 = vrsqrt.pop %v90
      %v93 = vmul.f32 %v90, %v92
      %vm94 = vcmp.eq.f32.partialorder %v90, inf
      %v95 = vsel %vm94, %v90, %v93
      %vm96 = vcmp.eq.f32.partialorder %v90, 0.0
      %v97 = vand.u32 %v90, 2147483648
      %v98 = vsel %vm96, %v97, %v95
      %v99 = vrsqrt.pop %v91
      %v100 = vmul.f32 %v91, %v99
      %vm101 = vcmp.eq.f32.partialorder %v91, inf
      %v102 = vsel %vm101, %v91, %v100
      %vm103 = vcmp.eq.f32.partialorder %v91, 0.0
      %v104 = vand.u32 %v91, 2147483648
      %v105 = vsel %vm103, %v104, %v102
      %v106 = vadd.f32 %v98, %v105
      %v107 = vadd.f32 %v78, %v106
    $region26: #{tpu_custom_call.1} parent=1 // loop_footer
      %s75 = sadd.s32 %s73, 1
    $region27: #{tpu_custom_call.1} parent=1 // loop_footer_branch
      %72 = sbr.rel target = $region23
    $region28: #{tpu_custom_call.1} parent=1 // loop_exit
      _
    %v108 = vadd.f32 %v71, %v78
    %109 = vst [vmem:[#allocation2] sm:$0xff] %v108
    // Predicated region
    $region29: #{tpu_custom_call.1} parent=1 // pred_check
      %p110 = pneg %p60
    $region30: #{tpu_custom_call.1} parent=1 // pred_check_branch
      %112 = sbr.rel (%p110) target = $region32
    $region31: #{tpu_custom_call.1} parent=1 // pred_region
      %v113 = vld [vmem:[#allocation2] sm:$0xff]
      %114 = vst [vmem:[#allocation8] sm:$0xff] %v113
    $region32: #{tpu_custom_call.1} parent=1 // pred_fallthru
      _
    // Predicated region
    $region33: #{tpu_custom_call.1} parent=1 // pred_check
      _
    $region34: #{tpu_custom_call.1} parent=1 // pred_check_branch
      %116 = sbr.rel (0) target = $region36
    $region35: #{tpu_custom_call.1} parent=1 // pred_region
      %s118 = ssub.s32 128, 128
      %119 = vsyncadd [#allocation5], %s118
      %s121 = sshll.u32 [#allocation8], 4
      %s122 = int_to_ptr.vmem [resolvable:$true] %s121
      %124 = dma.vmem_to_hbm [thread:$0]  %s122, 128, %s2, [#allocation5]
    $region36: #{tpu_custom_call.1} parent=1 // pred_fallthru
      _
    // Predicated region
    $region37: #{tpu_custom_call.1} parent=1 // pred_check
      _
    $region38: #{tpu_custom_call.1} parent=1 // pred_check_branch
      %126 = sbr.rel (0) target = $region40
    $region39: #{tpu_custom_call.1} parent=1 // pred_region
      %127 = dma.done [#allocation5], 128
    $region40: #{tpu_custom_call.1} parent=1 // pred_fallthru
      _
    %128 = vsyncpa [#allocation4], 1
    %129 = vsyncpa [#allocation7], 1
    %130 = vsyncpa [#allocation5], 1

</llo_original>
